<compile_context>
chip_gen: v7x
topology: tpu7x:2x2x1
jax: 0.10.0
libtpu: 0.0.40
codegen_flags: <defaults>
</compile_context>

<pallas_src>
import jax
import jax.numpy as jnp
from jax.experimental import pallas as pl
from jax.experimental.pallas import tpu as pltpu  # noqa: F401  (imported for completeness)


def _copy_kernel(x_ref, o_ref):
    # Single full-array tile resident in VMEM: one lane-dense vector copy.
    o_ref[...] = x_ref[...]


@jax.jit
def view_49_49(x):
    """Equivalent of torch: x.view(49, 49, -1) for x of shape (49*49, C)."""
    rows, feat = x.shape
    assert rows == 49 * 49, "row count must be 49*49"

    # Metadata-only reshape to a lane-dense 2-D slab (49, 49*C).
    x2 = jnp.reshape(x, (49, 49 * feat))

    out2 = pl.pallas_call(
        _copy_kernel,
        out_shape=jax.ShapeDtypeStruct((49, 49 * feat), x.dtype),
        # Full-array blocks (allowed even though not (8,128)-aligned because
        # block_shape equals the array dims); no grid needed.
        in_specs=[pl.BlockSpec((49, 49 * feat), lambda: (0, 0))],
        out_specs=pl.BlockSpec((49, 49 * feat), lambda: (0, 0)),
    )(x2)

    # Metadata-only split of the last dim back to the torch .view shape.
    return jnp.reshape(out2, (49, 49, feat))


if __name__ == "__main__":
    key = jax.random.PRNGKey(0)
    x414 = jax.random.normal(key, (2401, 16), dtype=jnp.float32)

    # Reference semantics of torch.view.
    ref = jnp.reshape(x414, (49, 49, 16))

    out = view_49_49(x414)
    jax.block_until_ready(out)

    assert out.shape == (49, 49, 16), out.shape
    assert jnp.array_equal(out, ref), "mismatch vs reference reshape"

    print("KERNEL_OK")
</pallas_src>

<mosaic_0001>
module attributes {stable_mosaic.version = 11 : i64} {
  func.func @_copy_kernel(%arg0: memref<49x784xf32, #tpu.memory_space<vmem>>, %arg1: memref<49x784xf32, #tpu.memory_space<vmem>>) attributes {dimension_semantics = [], scalar_prefetch = 0 : i64, scratch_operands = 0 : i64, tpu.core_type = #tpu.core_type<tc>} {
    %c0 = arith.constant 0 : index
    %c0_0 = arith.constant 0 : index
    %0 = vector.load %arg0[%c0, %c0_0] : memref<49x784xf32, #tpu.memory_space<vmem>>, vector<49x784xf32>
    %c0_1 = arith.constant 0 : index
    %c0_2 = arith.constant 0 : index
    %1 = vector.load %arg1[%c0_1, %c0_2] : memref<49x784xf32, #tpu.memory_space<vmem>>, vector<49x784xf32>
    tpu.vector_store %arg1[%c0_1, %c0_2], %0 {strides = array<i32>} : memref<49x784xf32, #tpu.memory_space<vmem>>, vector<49x784xf32>,
    return
  }
}

</mosaic_0001>

<llo_original>
// kernel: view_49_49.1
$region0: #{view_49_49.1}
  #allocation0 [shape = 'u32[]', space=smem, size = 0x4, offset = 0x4, fixed_abs, tag = 'smem constant byte address 0x4 - core index']
  #allocation1 [shape = 'u32[144,128]{1,0:T(1,128)}', space=vmem, size = 0x12000, scoped, tag = 'internal scratch']
  %s0 = inlined_call_operand.vmem [shape: f32[49,784], index: 0, kind: input, shape index: {}]
  %s1 = inlined_call_operand.vmem [shape: f32[49,784], index: 1, kind: output, shape index: {}]
  %s2 = sld [smem:[#allocation0]]
  $region14: #{view_49_49.1} parent=0
    _
  %s4 = ssub.s32 1, %s2
  %s5 = scalar_select 0, %s4, %s2
  // Predicated region
  $region2: #{view_49_49.1} parent=0 // pred_check
    _
  $region3: #{view_49_49.1} parent=0 // pred_check_branch
    %7 = sbr.rel (0) target = $region5
  $region4: #{view_49_49.1} parent=0 // pred_region
    _
  $region5: #{view_49_49.1} parent=0 // pred_fallthru
    _
  %v8 = vld [vmem:[%s0] sm:$0xff]
  %v9 = vld [vmem:[%s0 + $0x8] sm:$0xff]
  %v10 = vld [vmem:[%s0 + $0x10] sm:$0xff]
  %v11 = vld [vmem:[%s0 + $0x18] sm:$0xff]
  %v12 = vld [vmem:[%s0 + $0x20] sm:$0xff]
  %v13 = vld [vmem:[%s0 + $0x28] sm:$0xff]
  %v14 = vld [vmem:[%s0 + $0x30] sm:$0xff]
  %v15 = vld [vmem:[%s0 + $0x38] sm:$0xff]
  %v16 = vld [vmem:[%s0 + $0x40] sm:$0xff]
  %v17 = vld [vmem:[%s0 + $0x48] sm:$0xff]
  %v18 = vld [vmem:[%s0 + $0x50] sm:$0xff]
  %v19 = vld [vmem:[%s0 + $0x58] sm:$0xff]
  %v20 = vld [vmem:[%s0 + $0x60] sm:$0xff]
  %v21 = vld [vmem:[%s0 + $0x68] sm:$0xff]
  %v22 = vld [vmem:[%s0 + $0x70] sm:$0xff]
  %v23 = vld [vmem:[%s0 + $0x78] sm:$0xff]
  %v24 = vld [vmem:[%s0 + $0x80] sm:$0xff]
  %v25 = vld [vmem:[%s0 + $0x88] sm:$0xff]
  %v26 = vld [vmem:[%s0 + $0x90] sm:$0xff]
  %v27 = vld [vmem:[%s0 + $0x98] sm:$0xff]
  %v28 = vld [vmem:[%s0 + $0xa0] sm:$0xff]
  %v29 = vld [vmem:[%s0 + $0xa8] sm:$0xff]
  %v30 = vld [vmem:[%s0 + $0xb0] sm:$0xff]
  %v31 = vld [vmem:[%s0 + $0xb8] sm:$0xff]
  %v32 = vld [vmem:[%s0 + $0xc0] sm:$0xff]
  %v33 = vld [vmem:[%s0 + $0xc8] sm:$0xff]
  %v34 = vld [vmem:[%s0 + $0xd0] sm:$0xff]
  %v35 = vld [vmem:[%s0 + $0xd8] sm:$0xff]
  %v36 = vld [vmem:[%s0 + $0xe0] sm:$0xff]
  %v37 = vld [vmem:[%s0 + $0xe8] sm:$0xff]
  %v38 = vld [vmem:[%s0 + $0xf0] sm:$0xff]
  %v39 = vld [vmem:[%s0 + $0xf8] sm:$0xff]
  %v40 = vld [vmem:[%s0 + $0x100] sm:$0xff]
  %v41 = vld [vmem:[%s0 + $0x108] sm:$0xff]
  %v42 = vld [vmem:[%s0 + $0x110] sm:$0xff]
  %v43 = vld [vmem:[%s0 + $0x118] sm:$0xff]
  %v44 = vld [vmem:[%s0 + $0x120] sm:$0xff]
  %v45 = vld [vmem:[%s0 + $0x128] sm:$0xff]
  %v46 = vld [vmem:[%s0 + $0x130] sm:$0xff]
  %v47 = vld [vmem:[%s0 + $0x138] sm:$0xff]
  %v48 = vld [vmem:[%s0 + $0x140] sm:$0xff]
  %v49 = vld [vmem:[%s0 + $0x148] sm:$0xff]
  %v50 = vld [vmem:[%s0 + $0x150] sm:$0x1]
  %v51 = vld [vmem:[%s0 + $0x158] sm:$0x1]
  %v52 = vld [vmem:[%s0 + $0x160] sm:$0x1]
  %v53 = vld [vmem:[%s0 + $0x168] sm:$0x1]
  %v54 = vld [vmem:[%s0 + $0x170] sm:$0x1]
  %v55 = vld [vmem:[%s0 + $0x178] sm:$0x1]
  %v56 = vld [vmem:[%s0 + $0x180] sm:$0x1]
  %57 = vst [vmem:[%s1] sm:$0xff] %v8
  %58 = vst [vmem:[%s1 + $0x8] sm:$0xff] %v9
  %59 = vst [vmem:[%s1 + $0x10] sm:$0xff] %v10
  %60 = vst [vmem:[%s1 + $0x18] sm:$0xff] %v11
  %61 = vst [vmem:[%s1 + $0x20] sm:$0xff] %v12
  %62 = vst [vmem:[%s1 + $0x28] sm:$0xff] %v13
  %vm63 = vcmask 130048
  %64 = vst.msk [vmem:[%s1 + $0x30] sm:$0xff] %vm63, %v14
  %65 = vst [vmem:[%s1 + $0x38] sm:$0xff] %v15
  %66 = vst [vmem:[%s1 + $0x40] sm:$0xff] %v16
  %67 = vst [vmem:[%s1 + $0x48] sm:$0xff] %v17
  %68 = vst [vmem:[%s1 + $0x50] sm:$0xff] %v18
  %69 = vst [vmem:[%s1 + $0x58] sm:$0xff] %v19
  %70 = vst [vmem:[%s1 + $0x60] sm:$0xff] %v20
  %71 = vst.msk [vmem:[%s1 + $0x68] sm:$0xff] %vm63, %v21
  %72 = vst [vmem:[%s1 + $0x70] sm:$0xff] %v22
  %73 = vst [vmem:[%s1 + $0x78] sm:$0xff] %v23
  %74 = vst [vmem:[%s1 + $0x80] sm:$0xff] %v24
  %75 = vst [vmem:[%s1 + $0x88] sm:$0xff] %v25
  %76 = vst [vmem:[%s1 + $0x90] sm:$0xff] %v26
  %77 = vst [vmem:[%s1 + $0x98] sm:$0xff] %v27
  %78 = vst.msk [vmem:[%s1 + $0xa0] sm:$0xff] %vm63, %v28
  %79 = vst [vmem:[%s1 + $0xa8] sm:$0xff] %v29
  %80 = vst [vmem:[%s1 + $0xb0] sm:$0xff] %v30
  %81 = vst [vmem:[%s1 + $0xb8] sm:$0xff] %v31
  %82 = vst [vmem:[%s1 + $0xc0] sm:$0xff] %v32
  %83 = vst [vmem:[%s1 + $0xc8] sm:$0xff] %v33
  %84 = vst [vmem:[%s1 + $0xd0] sm:$0xff] %v34
  %85 = vst.msk [vmem:[%s1 + $0xd8] sm:$0xff] %vm63, %v35
  %86 = vst [vmem:[%s1 + $0xe0] sm:$0xff] %v36
  %87 = vst [vmem:[%s1 + $0xe8] sm:$0xff] %v37
  %88 = vst [vmem:[%s1 + $0xf0] sm:$0xff] %v38
  %89 = vst [vmem:[%s1 + $0xf8] sm:$0xff] %v39
  %90 = vst [vmem:[%s1 + $0x100] sm:$0xff] %v40
  %91 = vst [vmem:[%s1 + $0x108] sm:$0xff] %v41
  %92 = vst.msk [vmem:[%s1 + $0x110] sm:$0xff] %vm63, %v42
  %93 = vst [vmem:[%s1 + $0x118] sm:$0xff] %v43
  %94 = vst [vmem:[%s1 + $0x120] sm:$0xff] %v44
  %95 = vst [vmem:[%s1 + $0x128] sm:$0xff] %v45
  %96 = vst [vmem:[%s1 + $0x130] sm:$0xff] %v46
  %97 = vst [vmem:[%s1 + $0x138] sm:$0xff] %v47
  %98 = vst [vmem:[%s1 + $0x140] sm:$0xff] %v48
  %99 = vst.msk [vmem:[%s1 + $0x148] sm:$0xff] %vm63, %v49
  %100 = vst [vmem:[%s1 + $0x150] sm:$0x1] %v50
  %101 = vst [vmem:[%s1 + $0x158] sm:$0x1] %v51
  %102 = vst [vmem:[%s1 + $0x160] sm:$0x1] %v52
  %103 = vst [vmem:[%s1 + $0x168] sm:$0x1] %v53
  %104 = vst [vmem:[%s1 + $0x170] sm:$0x1] %v54
  %105 = vst [vmem:[%s1 + $0x178] sm:$0x1] %v55
  %vm106 = vcmask 122880
  %107 = vst.msk [vmem:[%s1 + $0x180] sm:$0x1] %vm106, %v56
  // Predicated region
  $region6: #{view_49_49.1} parent=0 // pred_check
    _
  $region7: #{view_49_49.1} parent=0 // pred_check_branch
    %109 = sbr.rel (0) target = $region9
  $region8: #{view_49_49.1} parent=0 // pred_region
    _
  $region9: #{view_49_49.1} parent=0 // pred_fallthru
    _
  // Predicated region
  $region10: #{view_49_49.1} parent=0 // pred_check
    _
  $region11: #{view_49_49.1} parent=0 // pred_check_branch
    %111 = sbr.rel (0) target = $region13
  $region12: #{view_49_49.1} parent=0 // pred_region
    _
  $region13: #{view_49_49.1} parent=0 // pred_fallthru
    _

</llo_original>
